<compile_context>
chip_gen: v5e
topology: v5e:2x2
jax: 0.10.0
libtpu: 0.0.40
codegen_flags: <defaults>
</compile_context>

<pallas_src>
import jax
import jax.numpy as jnp
from jax.experimental import pallas as pl
from jax.experimental.pallas import tpu as pltpu


# ----------------------------------------------------------------------------
# Activation + derivative (used inside the kernel)
# ----------------------------------------------------------------------------
def _act_and_deriv(z, activation):
    if activation == 'relu':
        a = jnp.maximum(z, 0.0)
        d = (z > 0.0).astype(z.dtype)
    elif activation == 'tanh':
        a = jnp.tanh(z)
        d = 1.0 - a * a
    elif activation == 'silu':
        s = jax.nn.sigmoid(z)
        a = z * s
        d = s * (1.0 + z * (1.0 - s))
    else:
        raise ValueError(f"unknown activation {activation}")
    return a, d


def _round_up(v, m):
    return ((v + m - 1) // m) * m


# ----------------------------------------------------------------------------
# Pallas kernel: fused MLP forward + in-kernel reverse-mode grads wrt (t, x, y)
#
# Batch-on-lanes layout.  Per grid step, the refs are:
#   x_ref                    : [6, T]              (model_in^T tile)
#   (wt_l, b_l) * n_layers   : [Dout_l, Din_l], [Dout_l, 1]   (forward weights)
#   w_last_col               : [D_{L-1}, 1]        (last-layer W, for bwd seed)
#   w_mid_1 .. w_mid_{L-2}   : [Din_l, Dout_l]     (hidden W, for bwd matmuls)
#   w0_bwd3                  : [3, D_1]            (W0[:3, :], final bwd matmul)
#   out_ref                  : [4, T]              (u, du/dt, du/dx, du/dy)
# ----------------------------------------------------------------------------
def make_pinn_kernel(n_layers, activation):
    assert n_layers >= 2
    n_mid = n_layers - 2

    def kernel(*refs):
        idx = 0
        x_ref = refs[idx]; idx += 1
        wt_refs, b_refs = [], []
        for _ in range(n_layers):
            wt_refs.append(refs[idx]); idx += 1
            b_refs.append(refs[idx]); idx += 1
        w_last_col_ref = refs[idx]; idx += 1
        w_mid_refs = [refs[idx + i] for i in range(n_mid)]; idx += n_mid
        w0_bwd3_ref = refs[idx]; idx += 1
        out_ref = refs[idx]

        # ------------------------- forward sweep ----------------------------
        a = x_ref[...]                                   # [6, T]
        derivs = []                                      # act'(z_l) per hidden layer
        u = None
        for l in range(n_layers):
            wt = wt_refs[l][...]                         # [Dout, Din]
            b = b_refs[l][...]                           # [Dout, 1]
            z = jnp.dot(wt, a, preferred_element_type=jnp.float32) + b
            if l < n_layers - 1:
                a, d = _act_and_deriv(z, activation)
                derivs.append(d)
            else:
                u = z                                    # [1, T]

        # ------------------------ backward sweep -----------------------------
        # Cotangent wrt the last hidden activation: last-layer weight column,
        # broadcast over the batch lanes (output cotangent is 1).
        c = jnp.broadcast_to(w_last_col_ref[...], derivs[-1].shape)   # [D_{L-1}, T]
        for l in range(n_layers - 2, 0, -1):
            c = jnp.dot(w_mid_refs[l - 1][...], derivs[l] * c,
                        preferred_element_type=jnp.float32)
        grads3 = jnp.dot(w0_bwd3_ref[...], derivs[0] * c,
                         preferred_element_type=jnp.float32)          # [3, T]

        out_ref[0:1, :] = u
        out_ref[1:4, :] = grads3

    return kernel


# ----------------------------------------------------------------------------
# Wrapper mirroring PINN_Bayesian (deterministic, synthetic parameters)
# ----------------------------------------------------------------------------
class PINNBayesianPallas:
    def __init__(self, layer_dims_list, activation_function='relu',
                 init_key=jax.random.PRNGKey(0), tile_b=1024):
        assert layer_dims_list[0] == 6, "model input is cat(t,x,y,s,wx,wy) -> 6 features"
        assert layer_dims_list[-1] == 1, "level-set output is scalar"
        assert len(layer_dims_list) >= 3, "need at least one hidden layer"
        assert tile_b % 128 == 0
        self.layer_dims = list(layer_dims_list)
        self.activation = activation_function
        self.n_layers = len(layer_dims_list) - 1
        self.tile_b = tile_b

        # Bayesian layer variational parameters (mu, rho) for weights & biases.
        key = init_key
        self.params = []
        for din, dout in zip(layer_dims_list[:-1], layer_dims_list[1:]):
            key, k1, k2 = jax.random.split(key, 3)
            w_mu = jax.random.uniform(k1, (din, dout), jnp.float32, -0.2, 0.2)
            w_rho = jnp.full((din, dout), -5.0, jnp.float32)
            b_mu = jax.random.uniform(k2, (1, dout), jnp.float32, -0.2, 0.2)
            b_rho = jnp.full((1, dout), -5.0, jnp.float32)
            self.params.append((w_mu, w_rho, b_mu, b_rho))

    def sample_weights(self, key):
        """sample=True path of MLP_Bayesian: w = mu + softplus(rho) * eps."""
        ws = []
        for (w_mu, w_rho, b_mu, b_rho) in self.params:
            key, k1, k2 = jax.random.split(key, 3)
            w = w_mu + jax.nn.softplus(w_rho) * jax.random.normal(k1, w_mu.shape, jnp.float32)
            b = b_mu + jax.nn.softplus(b_rho) * jax.random.normal(k2, b_mu.shape, jnp.float32)
            ws.append((w, b))
        return ws

    def __call__(self, t, x, y, s, wx, wy, sample_key):
        # Glue: concatenation + Bayesian weight sampling stay in plain JAX.
        model_in = jnp.concatenate([t, x, y, s, wx, wy], axis=1).astype(jnp.float32)
        B = model_in.shape[0]
        sampled = self.sample_weights(sample_key)

        # Forward operands: W^T and b^T per layer.
        fwd_params = []
        for w, b in sampled:
            fwd_params.append(jnp.asarray(w.T, jnp.float32))    # [Dout, Din]
            fwd_params.append(jnp.asarray(b.T, jnp.float32))    # [Dout, 1]
        # Backward operands: un-transposed weights (tiny, resident in VMEM).
        w_last_col = jnp.asarray(sampled[-1][0], jnp.float32)                 # [D_{L-1}, 1]
        w_mids = [jnp.asarray(sampled[l][0], jnp.float32)
                  for l in range(1, self.n_layers - 1)]                       # [Din, Dout]
        w0_bwd3 = jnp.asarray(sampled[0][0][:3, :], jnp.float32)              # [3, D_1]

        # Batch-on-lanes layout: [6, B_pad], padded to a multiple of the tile.
        tile = min(self.tile_b, _round_up(B, 128))
        b_pad = _round_up(B, tile)
        x_t = jnp.pad(model_in.T, ((0, 0), (0, b_pad - B)))                   # [6, B_pad]

        operands = [x_t] + fwd_params + [w_last_col] + w_mids + [w0_bwd3]

        in_specs = [pl.BlockSpec((6, tile), lambda i: (0, i))]
        for arr in operands[1:]:
            # Weights/biases: full-array blocks, constant index_map -> resident.
            in_specs.append(pl.BlockSpec(arr.shape, lambda i: (0, 0)))
        out_specs = pl.BlockSpec((4, tile), lambda i: (0, i))

        kernel = make_pinn_kernel(self.n_layers, self.activation)
        out = pl.pallas_call(
            kernel,
            out_shape=jax.ShapeDtypeStruct((4, b_pad), jnp.float32),
            grid=(b_pad // tile,),
            in_specs=in_specs,
            out_specs=out_specs,
            compiler_params=pltpu.CompilerParams(
                dimension_semantics=("parallel",)),
        )(*operands)

        out = out[:, :B].T                                                    # [B, 4]
        return out[:, 0:1], out[:, 1:2], out[:, 2:3], out[:, 3:4]

    # Pure-JAX reference (for correctness check only).
    def reference(self, t, x, y, s, wx, wy, sampled_wb):
        def mlp(inp):
            a = inp
            for l, (w, b) in enumerate(sampled_wb):
                z = a @ w + b
                if l < self.n_layers - 1:
                    a, _ = _act_and_deriv(z, self.activation)
                else:
                    a = z
            return a
        model_in = jnp.concatenate([t, x, y, s, wx, wy], axis=1).astype(jnp.float32)
        u = mlp(model_in)
        grads = jax.vmap(jax.grad(lambda row: mlp(row[None, :])[0, 0]))(model_in)  # [B, 6]
        return u, grads[:, 0:1], grads[:, 1:2], grads[:, 2:3]


# ----------------------------------------------------------------------------
if __name__ == "__main__":
    key = jax.random.PRNGKey(0)
    batch = 8
    layer_dims = [6, 32, 32, 1]

    k_in, k_model, k_sample = jax.random.split(key, 3)
    ks = jax.random.split(k_in, 6)
    t = jax.random.normal(ks[0], (batch, 1), jnp.float32)
    x = jax.random.normal(ks[1], (batch, 1), jnp.float32)
    y = jax.random.normal(ks[2], (batch, 1), jnp.float32)
    s = jax.random.normal(ks[3], (batch, 1), jnp.float32)
    wx = jax.random.normal(ks[4], (batch, 1), jnp.float32)
    wy = jax.random.normal(ks[5], (batch, 1), jnp.float32)

    model = PINNBayesianPallas(layer_dims, activation_function='tanh', init_key=k_model)

    u, dudt, dudx, dudy = model(t, x, y, s, wx, wy, k_sample)
    jax.block_until_ready((u, dudt, dudx, dudy))

    # Cross-check against pure-JAX autodiff reference with the same sampled weights.
    sampled = model.sample_weights(k_sample)
    u_r, dt_r, dx_r, dy_r = model.reference(t, x, y, s, wx, wy, sampled)
    for a, b in [(u, u_r), (dudt, dt_r), (dudx, dx_r), (dudy, dy_r)]:
        assert a.shape == (batch, 1)
        assert jnp.allclose(a, b, atol=1e-3, rtol=1e-3), (a, b)

    print("KERNEL_OK")
</pallas_src>

<mosaic_0001>
module attributes {stable_mosaic.version = 11 : i64} {
  func.func @kernel(%arg0: i32, %arg1: memref<6x128xf32, #tpu.memory_space<vmem>>, %arg2: memref<32x6xf32, #tpu.memory_space<vmem>>, %arg3: memref<32x1xf32, #tpu.memory_space<vmem>>, %arg4: memref<32x32xf32, #tpu.memory_space<vmem>>, %arg5: memref<32x1xf32, #tpu.memory_space<vmem>>, %arg6: memref<1x32xf32, #tpu.memory_space<vmem>>, %arg7: memref<1x1xf32, #tpu.memory_space<vmem>>, %arg8: memref<32x1xf32, #tpu.memory_space<vmem>>, %arg9: memref<32x32xf32, #tpu.memory_space<vmem>>, %arg10: memref<3x32xf32, #tpu.memory_space<vmem>>, %arg11: memref<4x128xf32, #tpu.memory_space<vmem>>) attributes {dimension_semantics = [#tpu.dimension_semantics<parallel>], iteration_bounds = array<i64: 1>, scalar_prefetch = 0 : i64, scratch_operands = 0 : i64, tpu.core_type = #tpu.core_type<tc>, window_params = [{transform_indices = @transform_0, window_bounds = array<i64: 6, 128>}, {pipeline_mode = #tpu.pipeline_mode<synchronous>, transform_indices = @transform_1, window_bounds = array<i64: 32, 6>}, {pipeline_mode = #tpu.pipeline_mode<synchronous>, transform_indices = @transform_2, window_bounds = array<i64: 32, 1>}, {pipeline_mode = #tpu.pipeline_mode<synchronous>, transform_indices = @transform_3, window_bounds = array<i64: 32, 32>}, {pipeline_mode = #tpu.pipeline_mode<synchronous>, transform_indices = @transform_4, window_bounds = array<i64: 32, 1>}, {pipeline_mode = #tpu.pipeline_mode<synchronous>, transform_indices = @transform_5, window_bounds = array<i64: 1, 32>}, {pipeline_mode = #tpu.pipeline_mode<synchronous>, transform_indices = @transform_6, window_bounds = array<i64: 1, 1>}, {pipeline_mode = #tpu.pipeline_mode<synchronous>, transform_indices = @transform_7, window_bounds = array<i64: 32, 1>}, {pipeline_mode = #tpu.pipeline_mode<synchronous>, transform_indices = @transform_8, window_bounds = array<i64: 32, 32>}, {pipeline_mode = #tpu.pipeline_mode<synchronous>, transform_indices = @transform_9, window_bounds = array<i64: 3, 32>}, {transform_indices = @transform_10, window_bounds = array<i64: 4, 128>}]} {
    %c0 = arith.constant 0 : index
    %c0_0 = arith.constant 0 : index
    %0 = vector.load %arg1[%c0, %c0_0] : memref<6x128xf32, #tpu.memory_space<vmem>>, vector<6x128xf32>
    %c0_1 = arith.constant 0 : index
    %c0_2 = arith.constant 0 : index
    %1 = vector.load %arg2[%c0_1, %c0_2] : memref<32x6xf32, #tpu.memory_space<vmem>>, vector<32x6xf32>
    %c0_3 = arith.constant 0 : index
    %c0_4 = arith.constant 0 : index
    %2 = vector.load %arg3[%c0_3, %c0_4] : memref<32x1xf32, #tpu.memory_space<vmem>>, vector<32x1xf32>
    %cst = arith.constant dense<0.000000e+00> : vector<32x128xf32>
    %3 = tpu.matmul %1, %0, %cst {dimension_numbers = #tpu.dot_dimension_numbers<[1], [0], [0], [1], [0, 0, 1, 1], [], []>} : vector<32x6xf32>, vector<6x128xf32>, vector<32x128xf32> -> vector<32x128xf32>
    %4 = vector.broadcast %2 : vector<32x1xf32> to vector<32x128xf32>
    %5 = arith.addf %3, %4 : vector<32x128xf32>
    %6 = math.tanh %5 : vector<32x128xf32>
    %7 = arith.mulf %6, %6 : vector<32x128xf32>
    %cst_5 = arith.constant 1.000000e+00 : f32
    %8 = vector.broadcast %cst_5 : f32 to vector<32x128xf32>
    %9 = arith.subf %8, %7 : vector<32x128xf32>
    %c0_6 = arith.constant 0 : index
    %c0_7 = arith.constant 0 : index
    %10 = vector.load %arg4[%c0_6, %c0_7] : memref<32x32xf32, #tpu.memory_space<vmem>>, vector<32x32xf32>
    %c0_8 = arith.constant 0 : index
    %c0_9 = arith.constant 0 : index
    %11 = vector.load %arg5[%c0_8, %c0_9] : memref<32x1xf32, #tpu.memory_space<vmem>>, vector<32x1xf32>
    %cst_10 = arith.constant dense<0.000000e+00> : vector<32x128xf32>
    %12 = tpu.matmul %10, %6, %cst_10 {dimension_numbers = #tpu.dot_dimension_numbers<[1], [0], [0], [1], [0, 0, 1, 1], [], []>} : vector<32x32xf32>, vector<32x128xf32>, vector<32x128xf32> -> vector<32x128xf32>
    %13 = vector.broadcast %11 : vector<32x1xf32> to vector<32x128xf32>
    %14 = arith.addf %12, %13 : vector<32x128xf32>
    %15 = math.tanh %14 : vector<32x128xf32>
    %16 = arith.mulf %15, %15 : vector<32x128xf32>
    %cst_11 = arith.constant 1.000000e+00 : f32
    %17 = vector.broadcast %cst_11 : f32 to vector<32x128xf32>
    %18 = arith.subf %17, %16 : vector<32x128xf32>
    %c0_12 = arith.constant 0 : index
    %c0_13 = arith.constant 0 : index
    %19 = vector.load %arg6[%c0_12, %c0_13] : memref<1x32xf32, #tpu.memory_space<vmem>>, vector<1x32xf32>
    %c0_14 = arith.constant 0 : index
    %c0_15 = arith.constant 0 : index
    %20 = vector.load %arg7[%c0_14, %c0_15] : memref<1x1xf32, #tpu.memory_space<vmem>>, vector<1x1xf32>
    %cst_16 = arith.constant dense<0.000000e+00> : vector<1x128xf32>
    %21 = tpu.matmul %19, %15, %cst_16 {dimension_numbers = #tpu.dot_dimension_numbers<[1], [0], [0], [1], [0, 0, 1, 1], [], []>} : vector<1x32xf32>, vector<32x128xf32>, vector<1x128xf32> -> vector<1x128xf32>
    %22 = vector.broadcast %20 : vector<1x1xf32> to vector<1x128xf32>
    %23 = arith.addf %21, %22 : vector<1x128xf32>
    %c0_17 = arith.constant 0 : index
    %c0_18 = arith.constant 0 : index
    %24 = vector.load %arg8[%c0_17, %c0_18] : memref<32x1xf32, #tpu.memory_space<vmem>>, vector<32x1xf32>
    %25 = vector.shape_cast %24 : vector<32x1xf32> to vector<32x1xf32>
    %26 = vector.broadcast %25 : vector<32x1xf32> to vector<32x128xf32>
    %c0_19 = arith.constant 0 : index
    %c0_20 = arith.constant 0 : index
    %27 = vector.load %arg9[%c0_19, %c0_20] : memref<32x32xf32, #tpu.memory_space<vmem>>, vector<32x32xf32>
    %28 = arith.mulf %18, %26 : vector<32x128xf32>
    %cst_21 = arith.constant dense<0.000000e+00> : vector<32x128xf32>
    %29 = tpu.matmul %27, %28, %cst_21 {dimension_numbers = #tpu.dot_dimension_numbers<[1], [0], [0], [1], [0, 0, 1, 1], [], []>} : vector<32x32xf32>, vector<32x128xf32>, vector<32x128xf32> -> vector<32x128xf32>
    %c0_22 = arith.constant 0 : index
    %c0_23 = arith.constant 0 : index
    %30 = vector.load %arg10[%c0_22, %c0_23] : memref<3x32xf32, #tpu.memory_space<vmem>>, vector<3x32xf32>
    %31 = arith.mulf %9, %29 : vector<32x128xf32>
    %cst_24 = arith.constant dense<0.000000e+00> : vector<3x128xf32>
    %32 = tpu.matmul %30, %31, %cst_24 {dimension_numbers = #tpu.dot_dimension_numbers<[1], [0], [0], [1], [0, 0, 1, 1], [], []>} : vector<3x32xf32>, vector<32x128xf32>, vector<3x128xf32> -> vector<3x128xf32>
    %c0_25 = arith.constant 0 : index
    %c0_26 = arith.constant 0 : index
    %33 = vector.load %arg11[%c0_25, %c0_26] : memref<4x128xf32, #tpu.memory_space<vmem>>, vector<1x128xf32>
    tpu.vector_store %arg11[%c0_25, %c0_26], %23 {strides = array<i32>} : memref<4x128xf32, #tpu.memory_space<vmem>>, vector<1x128xf32>,
    %c1 = arith.constant 1 : index
    %c0_27 = arith.constant 0 : index
    %34 = vector.load %arg11[%c1, %c0_27] : memref<4x128xf32, #tpu.memory_space<vmem>>, vector<3x128xf32>
    tpu.vector_store %arg11[%c1, %c0_27], %32 {strides = array<i32>} : memref<4x128xf32, #tpu.memory_space<vmem>>, vector<3x128xf32>,
    return
  }
  func.func @transform_0(%arg0: i32) -> (i32, i32) {
    %c0_i32 = arith.constant 0 : i32
    %c0_i32_0 = arith.constant 0 : i32
    return %c0_i32, %arg0 : i32, i32
  }
  func.func @transform_1(%arg0: i32) -> (i32, i32) {
    %c0_i32 = arith.constant 0 : i32
    %c0_i32_0 = arith.constant 0 : i32
    %c0_i32_1 = arith.constant 0 : i32
    return %c0_i32, %c0_i32_0 : i32, i32
  }
  func.func @transform_2(%arg0: i32) -> (i32, i32) {
    %c0_i32 = arith.constant 0 : i32
    %c0_i32_0 = arith.constant 0 : i32
    %c0_i32_1 = arith.constant 0 : i32
    return %c0_i32, %c0_i32_0 : i32, i32
  }
  func.func @transform_3(%arg0: i32) -> (i32, i32) {
    %c0_i32 = arith.constant 0 : i32
    %c0_i32_0 = arith.constant 0 : i32
    %c0_i32_1 = arith.constant 0 : i32
    return %c0_i32, %c0_i32_0 : i32, i32
  }
  func.func @transform_4(%arg0: i32) -> (i32, i32) {
    %c0_i32 = arith.constant 0 : i32
    %c0_i32_0 = arith.constant 0 : i32
    %c0_i32_1 = arith.constant 0 : i32
    return %c0_i32, %c0_i32_0 : i32, i32
  }
  func.func @transform_5(%arg0: i32) -> (i32, i32) {
    %c0_i32 = arith.constant 0 : i32
    %c0_i32_0 = arith.constant 0 : i32
    %c0_i32_1 = arith.constant 0 : i32
    return %c0_i32, %c0_i32_0 : i32, i32
  }
  func.func @transform_6(%arg0: i32) -> (i32, i32) {
    %c0_i32 = arith.constant 0 : i32
    %c0_i32_0 = arith.constant 0 : i32
    %c0_i32_1 = arith.constant 0 : i32
    return %c0_i32, %c0_i32_0 : i32, i32
  }
  func.func @transform_7(%arg0: i32) -> (i32, i32) {
    %c0_i32 = arith.constant 0 : i32
    %c0_i32_0 = arith.constant 0 : i32
    %c0_i32_1 = arith.constant 0 : i32
    return %c0_i32, %c0_i32_0 : i32, i32
  }
  func.func @transform_8(%arg0: i32) -> (i32, i32) {
    %c0_i32 = arith.constant 0 : i32
    %c0_i32_0 = arith.constant 0 : i32
    %c0_i32_1 = arith.constant 0 : i32
    return %c0_i32, %c0_i32_0 : i32, i32
  }
  func.func @transform_9(%arg0: i32) -> (i32, i32) {
    %c0_i32 = arith.constant 0 : i32
    %c0_i32_0 = arith.constant 0 : i32
    %c0_i32_1 = arith.constant 0 : i32
    return %c0_i32, %c0_i32_0 : i32, i32
  }
  func.func @transform_10(%arg0: i32) -> (i32, i32) {
    %c0_i32 = arith.constant 0 : i32
    %c0_i32_0 = arith.constant 0 : i32
    return %c0_i32, %arg0 : i32, i32
  }
}

</mosaic_0001>

<llo_original>
// kernel: tpu_custom_call.1
$region0: #{tpu_custom_call.1}
  #allocation0 [shape = 'u32[]', space=smem, size = 0x4, offset = 0x4, fixed_abs, tag = 'smem constant byte address 0x4 - core index']
  #allocation1 [shape = 'u32[72,128]{1,0:T(1,128)}', space=vmem, size = 0x9000, scoped, tag = 'internal scratch']
  #allocation2 [shape = 'f32[1,1]{1,0:T(1,128)S(1)}', space=vmem, size = 0x200, scoped, tag = 'scoped memory for tpu_custom_call.1']
  %s0 = inlined_call_operand.vmem [shape: f32[6,128], index: 0, kind: input, shape index: {}]
  %s1 = inlined_call_operand.vmem [shape: f32[32,6], index: 1, kind: input, shape index: {}]
  %s2 = inlined_call_operand.vmem [shape: f32[32,1], index: 2, kind: input, shape index: {}]
  %s3 = inlined_call_operand.vmem [shape: f32[32,32], index: 3, kind: input, shape index: {}]
  %s4 = inlined_call_operand.vmem [shape: f32[32,1], index: 4, kind: input, shape index: {}]
  %s5 = inlined_call_operand.vmem [shape: f32[1,32], index: 5, kind: input, shape index: {}]
  %s6 = inlined_call_operand.<no memory space> [shape: f32[1,1], index: 6, kind: input, shape index: {}]
  %s7 = inlined_call_operand.vmem [shape: f32[32,1], index: 7, kind: input, shape index: {}]
  %s8 = inlined_call_operand.vmem [shape: f32[32,32], index: 8, kind: input, shape index: {}]
  %s9 = inlined_call_operand.vmem [shape: f32[3,32], index: 9, kind: input, shape index: {}]
  %s10 = inlined_call_operand.hbm [shape: f32[4,128], index: 10, kind: output, shape index: {}]
  %s11 = sld [smem:[#allocation0]]
  $region50: #{tpu_custom_call.1} parent=0
    _
  %s13 = ssub.s32 1, %s11
  %s14 = scalar_select 0, %s13, %s11
  %v15 = vstv %s6
  %16 = vst [vmem:[#allocation2] sm:$0x1] %v15
  $region1: #{tpu_custom_call.1} parent=0
    #allocation3 [shape = 'u8[2048]{0}', space=vmem, size = 0x800, scoped, tag = 'output window, operand 0, single buffered']
    #allocation4 [shape = 's32[1]{0}', space=sflag, size = 0x4, scoped, tag = 'scoped memory for tpu_custom_call.1']
    %17 = vsyncpa [#allocation4], 0
    // Predicated region
    $region2: #{tpu_custom_call.1} parent=1 // pred_check
      _
    $region3: #{tpu_custom_call.1} parent=1 // pred_check_branch
      %19 = sbr.rel (0) target = $region5
    $region4: #{tpu_custom_call.1} parent=1 // pred_region
      _
    $region5: #{tpu_custom_call.1} parent=1 // pred_fallthru
      _
    // Predicated region
    $region6: #{tpu_custom_call.1} parent=1 // pred_check
      _
    $region7: #{tpu_custom_call.1} parent=1 // pred_check_branch
      %21 = sbr.rel (0) target = $region9
    $region8: #{tpu_custom_call.1} parent=1 // pred_region
      _
    $region9: #{tpu_custom_call.1} parent=1 // pred_fallthru
      _
    // Predicated region
    $region10: #{tpu_custom_call.1} parent=1 // pred_check
      _
    $region11: #{tpu_custom_call.1} parent=1 // pred_check_branch
      %23 = sbr.rel (0) target = $region13
    $region12: #{tpu_custom_call.1} parent=1 // pred_region
      _
    $region13: #{tpu_custom_call.1} parent=1 // pred_fallthru
      _
    // Predicated region
    $region14: #{tpu_custom_call.1} parent=1 // pred_check
      _
    $region15: #{tpu_custom_call.1} parent=1 // pred_check_branch
      %25 = sbr.rel (0) target = $region17
    $region16: #{tpu_custom_call.1} parent=1 // pred_region
      _
    $region17: #{tpu_custom_call.1} parent=1 // pred_fallthru
      _
    // Predicated region
    $region18: #{tpu_custom_call.1} parent=1 // pred_check
      _
    $region19: #{tpu_custom_call.1} parent=1 // pred_check_branch
      %27 = sbr.rel (0) target = $region21
    $region20: #{tpu_custom_call.1} parent=1 // pred_region
      _
    $region21: #{tpu_custom_call.1} parent=1 // pred_fallthru
      _
    // Predicated region
    $region22: #{tpu_custom_call.1} parent=1 // pred_check
      _
    $region23: #{tpu_custom_call.1} parent=1 // pred_check_branch
      %29 = sbr.rel (0) target = $region25
    $region24: #{tpu_custom_call.1} parent=1 // pred_region
      _
    $region25: #{tpu_custom_call.1} parent=1 // pred_fallthru
      _
    // Predicated region
    $region26: #{tpu_custom_call.1} parent=1 // pred_check
      _
    $region27: #{tpu_custom_call.1} parent=1 // pred_check_branch
      %31 = sbr.rel (0) target = $region29
    $region28: #{tpu_custom_call.1} parent=1 // pred_region
      _
    $region29: #{tpu_custom_call.1} parent=1 // pred_fallthru
      _
    // Predicated region
    $region30: #{tpu_custom_call.1} parent=1 // pred_check
      _
    $region31: #{tpu_custom_call.1} parent=1 // pred_check_branch
      %33 = sbr.rel (0) target = $region33
    $region32: #{tpu_custom_call.1} parent=1 // pred_region
      _
    $region33: #{tpu_custom_call.1} parent=1 // pred_fallthru
      _
    // Predicated region
    $region34: #{tpu_custom_call.1} parent=1 // pred_check
      _
    $region35: #{tpu_custom_call.1} parent=1 // pred_check_branch
      %35 = sbr.rel (0) target = $region37
    $region36: #{tpu_custom_call.1} parent=1 // pred_region
      _
    $region37: #{tpu_custom_call.1} parent=1 // pred_fallthru
      _
    // Predicated region
    $region38: #{tpu_custom_call.1} parent=1 // pred_check
      _
    $region39: #{tpu_custom_call.1} parent=1 // pred_check_branch
      %37 = sbr.rel (0) target = $region41
    $region40: #{tpu_custom_call.1} parent=1 // pred_region
      _
    $region41: #{tpu_custom_call.1} parent=1 // pred_fallthru
      _
    %v38 = vld [vmem:[%s0] sm:$0x3f]
    %v39 = vld [vmem:[%s1] sm:$0xff]
    %v40 = vld [vmem:[%s1 + $0x8] sm:$0xff]
    %v41 = vld [vmem:[%s1 + $0x10] sm:$0xff]
    %v42 = vld [vmem:[%s1 + $0x18] sm:$0xff]
    %v43 = vld [vmem:[%s2] sm:$0xff]
    %v44 = vld [vmem:[%s2 + $0x8] sm:$0xff]
    %v45 = vld [vmem:[%s2 + $0x10] sm:$0xff]
    %v46 = vld [vmem:[%s2 + $0x18] sm:$0xff]
    %48 = vset.pattern.permute.xlu0 0
    %49 = vperm.xlu0 %48, %v43
    %v50 = vpop.permute.xlu0 %49
    %53 = vset.pattern.permute.xlu0 0
    %54 = vperm.xlu0 %53, %v44
    %v55 = vpop.permute.xlu0 %54
    %58 = vset.pattern.permute.xlu0 0
    %59 = vperm.xlu0 %58, %v45
    %v60 = vpop.permute.xlu0 %59
    %63 = vset.pattern.permute.xlu0 0
    %64 = vperm.xlu0 %63, %v46
    %v65 = vpop.permute.xlu0 %64
    %vm67 = vcmask 48128
    %v69 = vsel %vm67, %v39, 0
    %v72 = vsel %vm67, %v40, 0
    %v75 = vsel %vm67, %v41, 0
    %v78 = vsel %vm67, %v42, 0
    %vm80 = vcmask 1045504
    %v82 = vsel %vm80, %v38, 0
    %84 = vmatpush.msra.mxu0 0.0
    %85 = vmatpush.msra.mxu0 0.0
    %86 = vmatpush.msra.mxu0 0.0
    %87 = vmatpush.msra.mxu0 0.0
    %88 = vmatpush.msra.mxu0 0.0
    %89 = vmatpush.msra.mxu0 0.0
    %90 = vmatpush.msra.mxu0 0.0
    %91 = vmatpush.msra.mxu0 0.0
    %92 = vmatpush.msra.mxu0 0.0
    %93 = vmatpush.msra.mxu0 0.0
    %94 = vmatpush.msra.mxu0 0.0
    %95 = vmatpush.msra.mxu0 0.0
    %96 = vmatpush.msra.mxu0 0.0
    %97 = vmatpush.msra.mxu0 0.0
    %98 = vmatpush.msra.mxu0 0.0
    %99 = vmatpush.msra.mxu0 %v82
    %100 = vmatmul.f32.gmra.mxu0 %v69
    %v101 = vpop.f32.mrf.mxu0
    %v102 = vadd.f32 %v50, %v101
    %103 = vmatmul.f32.gmra.mxu0 %v72
    %v104 = vpop.f32.mrf.mxu0
    %v105 = vadd.f32 %v55, %v104
    %106 = vmatmul.f32.gmra.mxu0 %v75
    %v107 = vpop.f32.mrf.mxu0
    %v108 = vadd.f32 %v60, %v107
    %109 = vmatmul.f32.gmra.mxu0 %v78
    %v110 = vpop.f32.mrf.mxu0
    %v111 = vadd.f32 %v65, %v110
    %112 = vdwg.mxu0
    %v113 = vtanh.pop %v102
    %v114 = vtanh.pop %v105
    %v115 = vtanh.pop %v108
    %v116 = vtanh.pop %v111
    %v117 = vmul.f32 %v113, %v113
    %v118 = vmul.f32 %v114, %v114
    %v119 = vmul.f32 %v115, %v115
    %v120 = vmul.f32 %v116, %v116
    %v121 = vsub.f32 1.0, %v117
    %v122 = vsub.f32 1.0, %v118
    %v123 = vsub.f32 1.0, %v119
    %v124 = vsub.f32 1.0, %v120
    %v125 = vld [vmem:[%s3] sm:$0xff]
    %v126 = vld [vmem:[%s3 + $0x8] sm:$0xff]
    %v127 = vld [vmem:[%s3 + $0x10] sm:$0xff]
    %v128 = vld [vmem:[%s3 + $0x18] sm:$0xff]
    %v129 = vld [vmem:[%s4] sm:$0xff]
    %v130 = vld [vmem:[%s4 + $0x8] sm:$0xff]
    %v131 = vld [vmem:[%s4 + $0x10] sm:$0xff]
    %v132 = vld [vmem:[%s4 + $0x18] sm:$0xff]
    %134 = vset.pattern.permute.xlu0 0
    %135 = vperm.xlu0 %134, %v129
    %v136 = vpop.permute.xlu0 %135
    %139 = vset.pattern.permute.xlu0 0
    %140 = vperm.xlu0 %139, %v130
    %v141 = vpop.permute.xlu0 %140
    %144 = vset.pattern.permute.xlu0 0
    %145 = vperm.xlu0 %144, %v131
    %v146 = vpop.permute.xlu0 %145
    %149 = vset.pattern.permute.xlu0 0
    %150 = vperm.xlu0 %149, %v132
    %v151 = vpop.permute.xlu0 %150
    %vm153 = vcmask 261120
    %v155 = vsel %vm153, %v125, 0
    %v158 = vsel %vm153, %v126, 0
    %v161 = vsel %vm153, %v127, 0
    %v164 = vsel %vm153, %v128, 0
    %166 = vmatpush.msra.mxu0 0.0
    %167 = vmatpush.msra.mxu0 0.0
    %168 = vmatpush.msra.mxu0 0.0
    %169 = vmatpush.msra.mxu0 0.0
    %170 = vmatpush.msra.mxu0 0.0
    %171 = vmatpush.msra.mxu0 0.0
    %172 = vmatpush.msra.mxu0 0.0
    %173 = vmatpush.msra.mxu0 0.0
    %174 = vmatpush.msra.mxu0 0.0
    %175 = vmatpush.msra.mxu0 0.0
    %176 = vmatpush.msra.mxu0 0.0
    %177 = vmatpush.msra.mxu0 0.0
    %178 = vmatpush.msra.mxu0 %v116
    %179 = vmatpush.msra.mxu0 %v115
    %180 = vmatpush.msra.mxu0 %v114
    %181 = vmatpush.msra.mxu0 %v113
    %182 = vmatmul.f32.gmra.mxu0 %v155
    %v183 = vpop.f32.mrf.mxu0
    %v184 = vadd.f32 %v136, %v183
    %185 = vmatmul.f32.gmra.mxu0 %v158
    %v186 = vpop.f32.mrf.mxu0
    %v187 = vadd.f32 %v141, %v186
    %188 = vmatmul.f32.gmra.mxu0 %v161
    %v189 = vpop.f32.mrf.mxu0
    %v190 = vadd.f32 %v146, %v189
    %191 = vmatmul.f32.gmra.mxu0 %v164
    %v192 = vpop.f32.mrf.mxu0
    %v193 = vadd.f32 %v151, %v192
    %194 = vdwg.mxu0
    %v195 = vtanh.pop %v184
    %v196 = vtanh.pop %v187
    %v197 = vtanh.pop %v190
    %v198 = vtanh.pop %v193
    %v199 = vmul.f32 %v195, %v195
    %v200 = vmul.f32 %v196, %v196
    %v201 = vmul.f32 %v197, %v197
    %v202 = vmul.f32 %v198, %v198
    %v203 = vsub.f32 1.0, %v199
    %v204 = vsub.f32 1.0, %v200
    %v205 = vsub.f32 1.0, %v201
    %v206 = vsub.f32 1.0, %v202
    %v207 = vld [vmem:[%s5] sm:$0x1]
    %v208 = vld [vmem:[#allocation2] sm:$0x1]
    %210 = vset.pattern.permute.xlu0 0
    %211 = vperm.xlu0 %210, %v208
    %v212 = vpop.permute.xlu0 %211
    %v214 = vperm.slane %v212, 0
    %v216 = vsel %vm153, %v207, 0
    %218 = vmatpush.msra.mxu0 0.0
    %219 = vmatpush.msra.mxu0 0.0
    %220 = vmatpush.msra.mxu0 0.0
    %221 = vmatpush.msra.mxu0 0.0
    %222 = vmatpush.msra.mxu0 0.0
    %223 = vmatpush.msra.mxu0 0.0
    %224 = vmatpush.msra.mxu0 0.0
    %225 = vmatpush.msra.mxu0 0.0
    %226 = vmatpush.msra.mxu0 0.0
    %227 = vmatpush.msra.mxu0 0.0
    %228 = vmatpush.msra.mxu0 0.0
    %229 = vmatpush.msra.mxu0 0.0
    %230 = vmatpush.msra.mxu0 %v198
    %231 = vmatpush.msra.mxu0 %v197
    %232 = vmatpush.msra.mxu0 %v196
    %233 = vmatpush.msra.mxu0 %v195
    %234 = vmatmul.f32.gmra.mxu0 %v216
    %v235 = vpop.f32.mrf.mxu0
    %v236 = vadd.f32 %v214, %v235
    %237 = vdwg.mxu0
    %v238 = vld [vmem:[%s7] sm:$0xff]
    %v239 = vld [vmem:[%s7 + $0x8] sm:$0xff]
    %v240 = vld [vmem:[%s7 + $0x10] sm:$0xff]
    %v241 = vld [vmem:[%s7 + $0x18] sm:$0xff]
    %243 = vset.pattern.permute.xlu0 0
    %244 = vperm.xlu0 %243, %v238
    %v245 = vpop.permute.xlu0 %244
    %248 = vset.pattern.permute.xlu0 0
    %249 = vperm.xlu0 %248, %v239
    %v250 = vpop.permute.xlu0 %249
    %253 = vset.pattern.permute.xlu0 0
    %254 = vperm.xlu0 %253, %v240
    %v255 = vpop.permute.xlu0 %254
    %258 = vset.pattern.permute.xlu0 0
    %259 = vperm.xlu0 %258, %v241
    %v260 = vpop.permute.xlu0 %259
    %v262 = vld [vmem:[%s8] sm:$0xff]
    %v263 = vld [vmem:[%s8 + $0x8] sm:$0xff]
    %v264 = vld [vmem:[%s8 + $0x10] sm:$0xff]
    %v265 = vld [vmem:[%s8 + $0x18] sm:$0xff]
    %v266 = vmul.f32 %v203, %v245
    %v267 = vmul.f32 %v204, %v250
    %v268 = vmul.f32 %v205, %v255
    %v269 = vmul.f32 %v206, %v260
    %v271 = vsel %vm153, %v262, 0
    %v274 = vsel %vm153, %v263, 0
    %v277 = vsel %vm153, %v264, 0
    %v280 = vsel %vm153, %v265, 0
    %282 = vmatpush.msra.mxu0 0.0
    %283 = vmatpush.msra.mxu0 0.0
    %284 = vmatpush.msra.mxu0 0.0
    %285 = vmatpush.msra.mxu0 0.0
    %286 = vmatpush.msra.mxu0 0.0
    %287 = vmatpush.msra.mxu0 0.0
    %288 = vmatpush.msra.mxu0 0.0
    %289 = vmatpush.msra.mxu0 0.0
    %290 = vmatpush.msra.mxu0 0.0
    %291 = vmatpush.msra.mxu0 0.0
    %292 = vmatpush.msra.mxu0 0.0
    %293 = vmatpush.msra.mxu0 0.0
    %294 = vmatpush.msra.mxu0 %v269
    %295 = vmatpush.msra.mxu0 %v268
    %296 = vmatpush.msra.mxu0 %v267
    %297 = vmatpush.msra.mxu0 %v266
    %298 = vmatmul.f32.gmra.mxu0 %v271
    %v299 = vpop.f32.mrf.mxu0
    %v300 = vadd.f32 0.0, %v299
    %301 = vmatmul.f32.gmra.mxu0 %v274
    %v302 = vpop.f32.mrf.mxu0
    %v303 = vadd.f32 0.0, %v302
    %304 = vmatmul.f32.gmra.mxu0 %v277
    %v305 = vpop.f32.mrf.mxu0
    %v306 = vadd.f32 0.0, %v305
    %307 = vmatmul.f32.gmra.mxu0 %v280
    %v308 = vpop.f32.mrf.mxu0
    %v309 = vadd.f32 0.0, %v308
    %310 = vdwg.mxu0
    %v311 = vld [vmem:[%s9] sm:$0x7]
    %v312 = vmul.f32 %v121, %v300
    %v313 = vmul.f32 %v122, %v303
    %v314 = vmul.f32 %v123, %v306
    %v315 = vmul.f32 %v124, %v309
    %v317 = vsel %vm153, %v311, 0
    %319 = vmatpush.msra.mxu0 0.0
    %320 = vmatpush.msra.mxu0 0.0
    %321 = vmatpush.msra.mxu0 0.0
    %322 = vmatpush.msra.mxu0 0.0
    %323 = vmatpush.msra.mxu0 0.0
    %324 = vmatpush.msra.mxu0 0.0
    %325 = vmatpush.msra.mxu0 0.0
    %326 = vmatpush.msra.mxu0 0.0
    %327 = vmatpush.msra.mxu0 0.0
    %328 = vmatpush.msra.mxu0 0.0
    %329 = vmatpush.msra.mxu0 0.0
    %330 = vmatpush.msra.mxu0 0.0
    %331 = vmatpush.msra.mxu0 %v315
    %332 = vmatpush.msra.mxu0 %v314
    %333 = vmatpush.msra.mxu0 %v313
    %334 = vmatpush.msra.mxu0 %v312
    %335 = vmatmul.f32.gmra.mxu0 %v317
    %v336 = vpop.f32.mrf.mxu0
    %v337 = vadd.f32 0.0, %v336
    %338 = vdwg.mxu0
    %339 = vst [vmem:[#allocation3] sm:$0x1] %v236
    %340 = vst [vmem:[#allocation3 + $0x1] sm:$0x7] %v337
    // Predicated region
    $region42: #{tpu_custom_call.1} parent=1 // pred_check
      _
    $region43: #{tpu_custom_call.1} parent=1 // pred_check_branch
      %342 = sbr.rel (0) target = $region45
    $region44: #{tpu_custom_call.1} parent=1 // pred_region
      %344 = vsyncadd [#allocation4], 0
      %s346 = sshll.u32 [#allocation3], 4
      %s347 = int_to_ptr.vmem [resolvable:$true] %s346
      %s348 = sshll.u32 %s10, 4
      %s349 = int_to_ptr.hbm [resolvable:$true] %s348
      %351 = dma.vmem_to_hbm [thread:$0]  %s347, 64, %s349, [#allocation4]
    $region45: #{tpu_custom_call.1} parent=1 // pred_fallthru
      _
    // Predicated region
    $region46: #{tpu_custom_call.1} parent=1 // pred_check
      _
    $region47: #{tpu_custom_call.1} parent=1 // pred_check_branch
      %353 = sbr.rel (0) target = $region49
    $region48: #{tpu_custom_call.1} parent=1 // pred_region
      %355 = dma.done [#allocation4], 64
    $region49: #{tpu_custom_call.1} parent=1 // pred_fallthru
      _
    %356 = vsyncpa [#allocation4], 1

</llo_original>
